<compile_context>
chip_gen: v7x
topology: tpu7x:2x2x1
jax: 0.10.0
libtpu: 0.0.40
codegen_flags: <defaults>
</compile_context>

<pallas_src>
import functools

import jax
import jax.numpy as jnp
from jax import lax
from jax.experimental import pallas as pl
from jax.experimental.pallas import tpu as pltpu

_SQRT_HALF = 0.7071067811865476   # sqrt(0.5), matches torch.sqrt(FloatTensor([0.5]))
_LANES = 128                      # uniform padded width of every linear
_N_SLABS = 10                     # proj + 3 x (fc_layer, glu.fc1, glu.fc2)


# --------------------------------------------------------------------------- #
# Kernel
# --------------------------------------------------------------------------- #
def lightwide_kernel(x_ref, w_ref, b_ref, o_ref, *, feat_dim):
    """One batch tile of the full LightWideEncoder forward.

    x_ref : (bb, feat_dim + 3) f32   wide features | 3 pre-offset ids (as f32)
    w_ref : (10, 128, 128)           packed, zero-padded weights (bf16 or f32)
    b_ref : (10, 128) f32            packed, zero-padded biases
    o_ref : (bb, 128) f32            lane-dense output slab (cols >= out_dim == 0)
    """
    wdt = w_ref.dtype
    xin = x_ref[...]                               # (bb, feat_dim + 3) f32
    bb = xin.shape[0]
    biases = b_ref[...]                            # (10, 128) f32, single load

    # ---- build 128-wide proj input: [wide | one_hot(week,sess,min) | 0] ------
    ids = xin[:, feat_dim:].astype(jnp.int32)      # (bb, 3), column offsets pre-added
    col = lax.broadcasted_iota(jnp.int32, (bb, _LANES), 1)
    hit = ((col == ids[:, 0:1]) | (col == ids[:, 1:2]) | (col == ids[:, 2:3]))
    wide128 = jnp.concatenate(
        [xin[:, :feat_dim], jnp.zeros((bb, _LANES - feat_dim), jnp.float32)],
        axis=1)
    x128 = wide128 + hit.astype(jnp.float32)       # (bb, 128)

    def linear(x_cast, idx):
        # x_cast already in weight dtype; f32 accumulation; f32 bias add.
        return (jnp.dot(x_cast, w_ref[idx], preferred_element_type=jnp.float32)
                + biases[idx:idx + 1, :])

    def feature_transformer(x, base):
        h = linear(x.astype(wdt), base)               # fc_layer (+dropout = id)
        h_c = h.astype(wdt)                           # cast once, reuse for GLU
        sig = jax.nn.sigmoid(linear(h_c, base + 1))   # glu.fc1 -> sigmoid
        glu = sig * linear(h_c, base + 2)             # glu.fc2, elementwise mul
        return (h + glu) * jnp.float32(_SQRT_HALF)    # residual, * sqrt(0.5)

    h = jax.nn.sigmoid(linear(x128.astype(wdt), 0))   # proj_layer + sigmoid
    h = feature_transformer(h, 1)                     # proj_dim -> 128
    h = feature_transformer(h, 4)                     # 128      -> 64
    h = feature_transformer(h, 7)                     # 64       -> output_dim
    o_ref[...] = h.astype(o_ref.dtype)


# --------------------------------------------------------------------------- #
# Parameters
# --------------------------------------------------------------------------- #
def init_params(key, config):
    """Deterministic Linear params, PyTorch-style uniform(-1/sqrt(fan_in), ...)."""
    input_size = (config['feat_dim'] + config['week_class']
                  + config['session_class'] + config['minute_class'])

    def linear_params(k, din, dout):
        k1, k2 = jax.random.split(k)
        bound = 1.0 / (din ** 0.5)
        w = jax.random.uniform(k1, (din, dout), jnp.float32, -bound, bound)
        b = jax.random.uniform(k2, (1, dout), jnp.float32, -bound, bound)
        return w, b

    keys = jax.random.split(key, 10)
    params = []
    params += list(linear_params(keys[0], input_size, config['proj_dim']))  # proj
    ki = 1
    ft_dims = [(config['proj_dim'], 128), (128, 64), (64, config['output_dim'])]
    for din, dout in ft_dims:
        params += list(linear_params(keys[ki], din, dout)); ki += 1         # fc_layer
        params += list(linear_params(keys[ki], dout, dout)); ki += 1        # glu.fc1
        params += list(linear_params(keys[ki], dout, dout)); ki += 1        # glu.fc2
    return params


def pack_params(params, config, weight_dtype=jnp.bfloat16):
    """Pack the 20 PyTorch-layout params into 2 kernel arrays.

    Every weight is zero-padded to a uniform (128, 128) slab, every bias to 128
    lanes.  The zero padding keeps all padded output lanes exactly 0 through the
    whole network, so the kernel never slices at a non-128-lane boundary.
    Slab order: 0 proj, 1-3 FT1(fc, glu.fc1, glu.fc2), 4-6 FT2, 7-9 FT3.
    """
    (wp, bp,
     w1f, b1f, w1a, b1a, w1b, b1b,
     w2f, b2f, w2a, b2a, w2b, b2b,
     w3f, b3f, w3a, b3a, w3b, b3b) = params
    Ws = [wp, w1f, w1a, w1b, w2f, w2a, w2b, w3f, w3a, w3b]
    Bs = [bp, b1f, b1a, b1b, b2f, b2a, b2b, b3f, b3a, b3b]
    for w in Ws:
        assert w.shape[0] <= _LANES and w.shape[1] <= _LANES, w.shape

    def pad_w(w):
        return jnp.pad(w, ((0, _LANES - w.shape[0]), (0, _LANES - w.shape[1])))

    def pad_b(b):
        b = b.reshape(-1)
        return jnp.pad(b, (0, _LANES - b.shape[0]))

    w_packed = jnp.stack([pad_w(w) for w in Ws]).astype(weight_dtype)   # (10,128,128)
    b_packed = jnp.stack([pad_b(b) for b in Bs]).astype(jnp.float32)    # (10,128)
    return w_packed, b_packed


# --------------------------------------------------------------------------- #
# Grid selection (generation-aware)
# --------------------------------------------------------------------------- #
def _round_up(x, m):
    return ((x + m - 1) // m) * m


def _num_tensorcores():
    """Best-effort TensorCore count of the attached chip (v7x: 2, v5e/v6e: 1)."""
    try:
        kind = jax.devices()[0].device_kind.lower()
    except Exception:
        return 1
    return 2 if ('v7' in kind or '7x' in kind) else 1


def _pick_grid(B, n_cores, max_tile=1024):
    """One big tile on 1-TC chips; a multiple-of-n_cores step count on v7x.

    max_tile=1024 keeps per-step VMEM (a few MiB incl. double buffers) well
    below v5e's 16 MiB default scoped limit, so no vmem_limit_bytes is needed.
    """
    bp8 = _round_up(max(B, 1), 8)
    steps = max(n_cores, -(-bp8 // max_tile))
    steps = _round_up(steps, n_cores)
    block_b = _round_up(-(-bp8 // steps), 8)
    return block_b, steps


# --------------------------------------------------------------------------- #
# Wrapper
# --------------------------------------------------------------------------- #
def lightwide_encoder(wide_x, week_x, session_x, minute_x, params, config,
                      block_b=None, weight_dtype=jnp.bfloat16):
    B, feat_dim = wide_x.shape
    assert feat_dim == config['feat_dim']
    n_cat = config['week_class'] + config['session_class'] + config['minute_class']
    assert feat_dim + n_cat <= _LANES and config['output_dim'] <= _LANES
    out_dim = config['output_dim']

    # Categorical ids with all column offsets pre-added (field offsets plus the
    # feat_dim base of the in-kernel 128-wide layout); carried as exact small
    # floats so they ride in the same f32 input array as the wide features.
    off_w = feat_dim
    off_s = feat_dim + config['week_class']
    off_m = off_s + config['session_class']
    ids_f = jnp.stack([week_x.astype(jnp.int32) + off_w,
                       session_x.astype(jnp.int32) + off_s,
                       minute_x.astype(jnp.int32) + off_m],
                      axis=-1).astype(jnp.float32)
    x_in = jnp.concatenate([wide_x.astype(jnp.float32), ids_f], axis=-1)

    if block_b is None:
        block_b, steps = _pick_grid(B, _num_tensorcores())
    else:
        block_b = _round_up(block_b, 8)
        steps = -(-B // block_b)
    Bp = block_b * steps
    if Bp != B:
        x_in = jnp.pad(x_in, ((0, Bp - B), (0, 0)))

    w_packed, b_packed = pack_params(params, config, weight_dtype)

    in_w = feat_dim + 3
    in_specs = [
        pl.BlockSpec((block_b, in_w), lambda i: (i, 0)),
        pl.BlockSpec(w_packed.shape, lambda i: (0, 0, 0)),   # grid-invariant
        pl.BlockSpec(b_packed.shape, lambda i: (0, 0)),      # grid-invariant
    ]
    out_spec = pl.BlockSpec((block_b, _LANES), lambda i: (i, 0))

    cost = pl.CostEstimate(
        flops=2 * Bp * _LANES * _LANES * _N_SLABS,
        transcendentals=4 * Bp * _LANES,
        bytes_accessed=(int(x_in.size) * 4
                        + int(w_packed.size) * w_packed.dtype.itemsize
                        + int(b_packed.size) * 4
                        + Bp * _LANES * 4),
    )

    out = pl.pallas_call(
        functools.partial(lightwide_kernel, feat_dim=feat_dim),
        out_shape=jax.ShapeDtypeStruct((Bp, _LANES), jnp.float32),
        grid=(steps,),
        in_specs=in_specs,
        out_specs=out_spec,
        compiler_params=pltpu.CompilerParams(
            dimension_semantics=("parallel",)),
        cost_estimate=cost,
    )(x_in, w_packed, b_packed)
    return out[:B, :out_dim]


# --------------------------------------------------------------------------- #
# Pure-JAX reference (eval-mode PyTorch forward)
# --------------------------------------------------------------------------- #
def lightwide_encoder_ref(wide_x, week_x, session_x, minute_x, params, config):
    week_oh = jax.nn.one_hot(week_x, config['week_class'], dtype=wide_x.dtype)
    sess_oh = jax.nn.one_hot(session_x, config['session_class'], dtype=wide_x.dtype)
    min_oh = jax.nn.one_hot(minute_x, config['minute_class'], dtype=wide_x.dtype)
    x = jnp.concatenate([wide_x, week_oh, sess_oh, min_oh], axis=-1)

    def lin(x, w, b):
        return x @ w + b

    (wp, bp,
     w1f, b1f, w1a, b1a, w1b, b1b,
     w2f, b2f, w2a, b2a, w2b, b2b,
     w3f, b3f, w3a, b3a, w3b, b3b) = params

    x = jax.nn.sigmoid(lin(x, wp, bp))
    for (wf, bf, wa, ba, wb, bb) in [(w1f, b1f, w1a, b1a, w1b, b1b),
                                     (w2f, b2f, w2a, b2a, w2b, b2b),
                                     (w3f, b3f, w3a, b3a, w3b, b3b)]:
        h = lin(x, wf, bf)
        glu = jax.nn.sigmoid(lin(h, wa, ba)) * lin(h, wb, bb)
        x = (h + glu) * jnp.float32(_SQRT_HALF)
    return x


# --------------------------------------------------------------------------- #
# Test
# --------------------------------------------------------------------------- #
if __name__ == "__main__":
    config = {
        'feat_dim': 16,
        'week_class': 7,
        'session_class': 4,
        'minute_class': 5,
        'proj_dim': 32,
        'output_dim': 16,
        'dropout': 0.1,   # identity in eval mode
        'device': 'cpu',
    }

    key = jax.random.PRNGKey(0)
    params = init_params(jax.random.fold_in(key, 0), config)

    def make_inputs(B):
        kw, kk, ks, km = jax.random.split(jax.random.fold_in(key, B), 4)
        wide = jax.random.normal(kw, (B, config['feat_dim']), jnp.float32)
        week = jax.random.randint(kk, (B,), 0, config['week_class'])
        sess = jax.random.randint(ks, (B,), 0, config['session_class'])
        minu = jax.random.randint(km, (B,), 0, config['minute_class'])
        return wide, week, sess, minu

    # B=8: single small tile.  B=40: auto grid (single tile on v5e/v6e, 2 on v7x).
    for B in (8, 40):
        wide, week, sess, minu = make_inputs(B)
        ref = lightwide_encoder_ref(wide, week, sess, minu, params, config)

        out_f32 = jax.block_until_ready(
            lightwide_encoder(wide, week, sess, minu, params, config,
                              weight_dtype=jnp.float32))
        assert out_f32.shape == (B, config['output_dim'])
        assert jnp.allclose(out_f32, ref, rtol=1e-4, atol=1e-4), f"f32 mismatch B={B}"

        out_bf16 = jax.block_until_ready(
            lightwide_encoder(wide, week, sess, minu, params, config))  # bf16 default
        assert out_bf16.shape == (B, config['output_dim'])
        assert jnp.allclose(out_bf16, ref, rtol=5e-2, atol=5e-2), f"bf16 mismatch B={B}"

    # Forced multi-step grid + batch padding path (block_b=16, B=40 -> Bp=48, grid=3).
    wide, week, sess, minu = make_inputs(40)
    ref = lightwide_encoder_ref(wide, week, sess, minu, params, config)
    out_mt = jax.block_until_ready(
        lightwide_encoder(wide, week, sess, minu, params, config,
                          block_b=16, weight_dtype=jnp.float32))
    assert out_mt.shape == (40, config['output_dim'])
    assert jnp.allclose(out_mt, ref, rtol=1e-4, atol=1e-4), "multi-tile mismatch"

    print("KERNEL_OK")
</pallas_src>

<mosaic_0001>
module attributes {stable_mosaic.version = 11 : i64} {
  func.func @lightwide_kernel(%arg0: i32, %arg1: memref<8x19xf32, #tpu.memory_space<vmem>>, %arg2: memref<10x128x128xf32, #tpu.memory_space<vmem>>, %arg3: memref<10x128xf32, #tpu.memory_space<vmem>>, %arg4: memref<8x128xf32, #tpu.memory_space<vmem>>) attributes {dimension_semantics = [#tpu.dimension_semantics<parallel>], iteration_bounds = array<i64: 1>, scalar_prefetch = 0 : i64, scratch_operands = 0 : i64, tpu.core_type = #tpu.core_type<tc>, window_params = [{transform_indices = @transform_0, window_bounds = array<i64: 8, 19>}, {pipeline_mode = #tpu.pipeline_mode<synchronous>, transform_indices = @transform_1, window_bounds = array<i64: 10, 128, 128>}, {pipeline_mode = #tpu.pipeline_mode<synchronous>, transform_indices = @transform_2, window_bounds = array<i64: 10, 128>}, {transform_indices = @transform_3, window_bounds = array<i64: 8, 128>}]} {
    %c0 = arith.constant 0 : index
    %c0_0 = arith.constant 0 : index
    %0 = vector.load %arg1[%c0, %c0_0] : memref<8x19xf32, #tpu.memory_space<vmem>>, vector<8x19xf32>
    %c0_1 = arith.constant 0 : index
    %c0_2 = arith.constant 0 : index
    %1 = vector.load %arg3[%c0_1, %c0_2] : memref<10x128xf32, #tpu.memory_space<vmem>>, vector<10x128xf32>
    %2 = vector.extract_strided_slice %0 {offsets = [0, 16], sizes = [8, 3], strides = [1, 1]} : vector<8x19xf32> to vector<8x3xf32>
    %3 = arith.fptosi %2 : vector<8x3xf32> to vector<8x3xi32>
    %4 = tpu.iota {dimensions = array<i32: 1>} : vector<8x128xi32>
    %5 = vector.extract_strided_slice %3 {offsets = [0, 0], sizes = [8, 1], strides = [1, 1]} : vector<8x3xi32> to vector<8x1xi32>
    %6 = vector.broadcast %5 : vector<8x1xi32> to vector<8x128xi32>
    %7 = arith.cmpi eq, %4, %6 : vector<8x128xi32>
    %8 = vector.extract_strided_slice %3 {offsets = [0, 1], sizes = [8, 1], strides = [1, 1]} : vector<8x3xi32> to vector<8x1xi32>
    %9 = vector.broadcast %8 : vector<8x1xi32> to vector<8x128xi32>
    %10 = arith.cmpi eq, %4, %9 : vector<8x128xi32>
    %11 = arith.ori %7, %10 : vector<8x128xi1>
    %12 = vector.extract_strided_slice %3 {offsets = [0, 2], sizes = [8, 1], strides = [1, 1]} : vector<8x3xi32> to vector<8x1xi32>
    %13 = vector.broadcast %12 : vector<8x1xi32> to vector<8x128xi32>
    %14 = arith.cmpi eq, %4, %13 : vector<8x128xi32>
    %15 = arith.ori %11, %14 : vector<8x128xi1>
    %16 = vector.extract_strided_slice %0 {offsets = [0, 0], sizes = [8, 16], strides = [1, 1]} : vector<8x19xf32> to vector<8x16xf32>
    %cst = arith.constant 0.000000e+00 : f32
    %17 = vector.broadcast %cst : f32 to vector<8x112xf32>
    %18 = tpu.concatenate %16, %17 in 1 : vector<8x16xf32>, vector<8x112xf32> -> vector<8x128xf32>
    %19 = arith.extui %15 : vector<8x128xi1> to vector<8x128xi32>
    %20 = arith.sitofp %19 : vector<8x128xi32> to vector<8x128xf32>
    %21 = arith.addf %18, %20 : vector<8x128xf32>
    %c0_3 = arith.constant 0 : index
    %c0_4 = arith.constant 0 : index
    %c0_5 = arith.constant 0 : index
    %22 = vector.load %arg2[%c0_3, %c0_4, %c0_5] : memref<10x128x128xf32, #tpu.memory_space<vmem>>, vector<1x128x128xf32>
    %23 = vector.shape_cast %22 : vector<1x128x128xf32> to vector<128x128xf32>
    %cst_6 = arith.constant dense<0.000000e+00> : vector<8x128xf32>
    %24 = tpu.matmul %21, %23, %cst_6 {dimension_numbers = #tpu.dot_dimension_numbers<[1], [0], [0], [1], [0, 0, 1, 1], [], []>} : vector<8x128xf32>, vector<128x128xf32>, vector<8x128xf32> -> vector<8x128xf32>
    %25 = vector.extract_strided_slice %1 {offsets = [0, 0], sizes = [1, 128], strides = [1, 1]} : vector<10x128xf32> to vector<1x128xf32>
    %26 = vector.broadcast %25 : vector<1x128xf32> to vector<8x128xf32>
    %27 = arith.addf %24, %26 : vector<8x128xf32>
    %28 = arith.negf %27 : vector<8x128xf32>
    %29 = math.exp %28 : vector<8x128xf32>
    %cst_7 = arith.constant 1.000000e+00 : f32
    %30 = vector.broadcast %cst_7 : f32 to vector<8x128xf32>
    %31 = arith.addf %30, %29 : vector<8x128xf32>
    %32 = arith.divf %30, %31 : vector<8x128xf32>
    %c1 = arith.constant 1 : index
    %c0_8 = arith.constant 0 : index
    %c0_9 = arith.constant 0 : index
    %33 = vector.load %arg2[%c1, %c0_8, %c0_9] : memref<10x128x128xf32, #tpu.memory_space<vmem>>, vector<1x128x128xf32>
    %34 = vector.shape_cast %33 : vector<1x128x128xf32> to vector<128x128xf32>
    %cst_10 = arith.constant dense<0.000000e+00> : vector<8x128xf32>
    %35 = tpu.matmul %32, %34, %cst_10 {dimension_numbers = #tpu.dot_dimension_numbers<[1], [0], [0], [1], [0, 0, 1, 1], [], []>} : vector<8x128xf32>, vector<128x128xf32>, vector<8x128xf32> -> vector<8x128xf32>
    %36 = vector.extract_strided_slice %1 {offsets = [1, 0], sizes = [1, 128], strides = [1, 1]} : vector<10x128xf32> to vector<1x128xf32>
    %37 = vector.broadcast %36 : vector<1x128xf32> to vector<8x128xf32>
    %38 = arith.addf %35, %37 : vector<8x128xf32>
    %c2 = arith.constant 2 : index
    %c0_11 = arith.constant 0 : index
    %c0_12 = arith.constant 0 : index
    %39 = vector.load %arg2[%c2, %c0_11, %c0_12] : memref<10x128x128xf32, #tpu.memory_space<vmem>>, vector<1x128x128xf32>
    %40 = vector.shape_cast %39 : vector<1x128x128xf32> to vector<128x128xf32>
    %cst_13 = arith.constant dense<0.000000e+00> : vector<8x128xf32>
    %41 = tpu.matmul %38, %40, %cst_13 {dimension_numbers = #tpu.dot_dimension_numbers<[1], [0], [0], [1], [0, 0, 1, 1], [], []>} : vector<8x128xf32>, vector<128x128xf32>, vector<8x128xf32> -> vector<8x128xf32>
    %42 = vector.extract_strided_slice %1 {offsets = [2, 0], sizes = [1, 128], strides = [1, 1]} : vector<10x128xf32> to vector<1x128xf32>
    %43 = vector.broadcast %42 : vector<1x128xf32> to vector<8x128xf32>
    %44 = arith.addf %41, %43 : vector<8x128xf32>
    %45 = arith.negf %44 : vector<8x128xf32>
    %46 = math.exp %45 : vector<8x128xf32>
    %cst_14 = arith.constant 1.000000e+00 : f32
    %47 = vector.broadcast %cst_14 : f32 to vector<8x128xf32>
    %48 = arith.addf %47, %46 : vector<8x128xf32>
    %49 = arith.divf %47, %48 : vector<8x128xf32>
    %c3 = arith.constant 3 : index
    %c0_15 = arith.constant 0 : index
    %c0_16 = arith.constant 0 : index
    %50 = vector.load %arg2[%c3, %c0_15, %c0_16] : memref<10x128x128xf32, #tpu.memory_space<vmem>>, vector<1x128x128xf32>
    %51 = vector.shape_cast %50 : vector<1x128x128xf32> to vector<128x128xf32>
    %cst_17 = arith.constant dense<0.000000e+00> : vector<8x128xf32>
    %52 = tpu.matmul %38, %51, %cst_17 {dimension_numbers = #tpu.dot_dimension_numbers<[1], [0], [0], [1], [0, 0, 1, 1], [], []>} : vector<8x128xf32>, vector<128x128xf32>, vector<8x128xf32> -> vector<8x128xf32>
    %53 = vector.extract_strided_slice %1 {offsets = [3, 0], sizes = [1, 128], strides = [1, 1]} : vector<10x128xf32> to vector<1x128xf32>
    %54 = vector.broadcast %53 : vector<1x128xf32> to vector<8x128xf32>
    %55 = arith.addf %52, %54 : vector<8x128xf32>
    %56 = arith.mulf %49, %55 : vector<8x128xf32>
    %57 = arith.addf %38, %56 : vector<8x128xf32>
    %cst_18 = arith.constant 0.707106769 : f32
    %58 = vector.broadcast %cst_18 : f32 to vector<8x128xf32>
    %59 = arith.mulf %57, %58 : vector<8x128xf32>
    %c4 = arith.constant 4 : index
    %c0_19 = arith.constant 0 : index
    %c0_20 = arith.constant 0 : index
    %60 = vector.load %arg2[%c4, %c0_19, %c0_20] : memref<10x128x128xf32, #tpu.memory_space<vmem>>, vector<1x128x128xf32>
    %61 = vector.shape_cast %60 : vector<1x128x128xf32> to vector<128x128xf32>
    %cst_21 = arith.constant dense<0.000000e+00> : vector<8x128xf32>
    %62 = tpu.matmul %59, %61, %cst_21 {dimension_numbers = #tpu.dot_dimension_numbers<[1], [0], [0], [1], [0, 0, 1, 1], [], []>} : vector<8x128xf32>, vector<128x128xf32>, vector<8x128xf32> -> vector<8x128xf32>
    %63 = vector.extract_strided_slice %1 {offsets = [4, 0], sizes = [1, 128], strides = [1, 1]} : vector<10x128xf32> to vector<1x128xf32>
    %64 = vector.broadcast %63 : vector<1x128xf32> to vector<8x128xf32>
    %65 = arith.addf %62, %64 : vector<8x128xf32>
    %c5 = arith.constant 5 : index
    %c0_22 = arith.constant 0 : index
    %c0_23 = arith.constant 0 : index
    %66 = vector.load %arg2[%c5, %c0_22, %c0_23] : memref<10x128x128xf32, #tpu.memory_space<vmem>>, vector<1x128x128xf32>
    %67 = vector.shape_cast %66 : vector<1x128x128xf32> to vector<128x128xf32>
    %cst_24 = arith.constant dense<0.000000e+00> : vector<8x128xf32>
    %68 = tpu.matmul %65, %67, %cst_24 {dimension_numbers = #tpu.dot_dimension_numbers<[1], [0], [0], [1], [0, 0, 1, 1], [], []>} : vector<8x128xf32>, vector<128x128xf32>, vector<8x128xf32> -> vector<8x128xf32>
    %69 = vector.extract_strided_slice %1 {offsets = [5, 0], sizes = [1, 128], strides = [1, 1]} : vector<10x128xf32> to vector<1x128xf32>
    %70 = vector.broadcast %69 : vector<1x128xf32> to vector<8x128xf32>
    %71 = arith.addf %68, %70 : vector<8x128xf32>
    %72 = arith.negf %71 : vector<8x128xf32>
    %73 = math.exp %72 : vector<8x128xf32>
    %cst_25 = arith.constant 1.000000e+00 : f32
    %74 = vector.broadcast %cst_25 : f32 to vector<8x128xf32>
    %75 = arith.addf %74, %73 : vector<8x128xf32>
    %76 = arith.divf %74, %75 : vector<8x128xf32>
    %c6 = arith.constant 6 : index
    %c0_26 = arith.constant 0 : index
    %c0_27 = arith.constant 0 : index
    %77 = vector.load %arg2[%c6, %c0_26, %c0_27] : memref<10x128x128xf32, #tpu.memory_space<vmem>>, vector<1x128x128xf32>
    %78 = vector.shape_cast %77 : vector<1x128x128xf32> to vector<128x128xf32>
    %cst_28 = arith.constant dense<0.000000e+00> : vector<8x128xf32>
    %79 = tpu.matmul %65, %78, %cst_28 {dimension_numbers = #tpu.dot_dimension_numbers<[1], [0], [0], [1], [0, 0, 1, 1], [], []>} : vector<8x128xf32>, vector<128x128xf32>, vector<8x128xf32> -> vector<8x128xf32>
    %80 = vector.extract_strided_slice %1 {offsets = [6, 0], sizes = [1, 128], strides = [1, 1]} : vector<10x128xf32> to vector<1x128xf32>
    %81 = vector.broadcast %80 : vector<1x128xf32> to vector<8x128xf32>
    %82 = arith.addf %79, %81 : vector<8x128xf32>
    %83 = arith.mulf %76, %82 : vector<8x128xf32>
    %84 = arith.addf %65, %83 : vector<8x128xf32>
    %cst_29 = arith.constant 0.707106769 : f32
    %85 = vector.broadcast %cst_29 : f32 to vector<8x128xf32>
    %86 = arith.mulf %84, %85 : vector<8x128xf32>
    %c7 = arith.constant 7 : index
    %c0_30 = arith.constant 0 : index
    %c0_31 = arith.constant 0 : index
    %87 = vector.load %arg2[%c7, %c0_30, %c0_31] : memref<10x128x128xf32, #tpu.memory_space<vmem>>, vector<1x128x128xf32>
    %88 = vector.shape_cast %87 : vector<1x128x128xf32> to vector<128x128xf32>
    %cst_32 = arith.constant dense<0.000000e+00> : vector<8x128xf32>
    %89 = tpu.matmul %86, %88, %cst_32 {dimension_numbers = #tpu.dot_dimension_numbers<[1], [0], [0], [1], [0, 0, 1, 1], [], []>} : vector<8x128xf32>, vector<128x128xf32>, vector<8x128xf32> -> vector<8x128xf32>
    %90 = vector.extract_strided_slice %1 {offsets = [7, 0], sizes = [1, 128], strides = [1, 1]} : vector<10x128xf32> to vector<1x128xf32>
    %91 = vector.broadcast %90 : vector<1x128xf32> to vector<8x128xf32>
    %92 = arith.addf %89, %91 : vector<8x128xf32>
    %c8 = arith.constant 8 : index
    %c0_33 = arith.constant 0 : index
    %c0_34 = arith.constant 0 : index
    %93 = vector.load %arg2[%c8, %c0_33, %c0_34] : memref<10x128x128xf32, #tpu.memory_space<vmem>>, vector<1x128x128xf32>
    %94 = vector.shape_cast %93 : vector<1x128x128xf32> to vector<128x128xf32>
    %cst_35 = arith.constant dense<0.000000e+00> : vector<8x128xf32>
    %95 = tpu.matmul %92, %94, %cst_35 {dimension_numbers = #tpu.dot_dimension_numbers<[1], [0], [0], [1], [0, 0, 1, 1], [], []>} : vector<8x128xf32>, vector<128x128xf32>, vector<8x128xf32> -> vector<8x128xf32>
    %96 = vector.extract_strided_slice %1 {offsets = [8, 0], sizes = [1, 128], strides = [1, 1]} : vector<10x128xf32> to vector<1x128xf32>
    %97 = vector.broadcast %96 : vector<1x128xf32> to vector<8x128xf32>
    %98 = arith.addf %95, %97 : vector<8x128xf32>
    %99 = arith.negf %98 : vector<8x128xf32>
    %100 = math.exp %99 : vector<8x128xf32>
    %cst_36 = arith.constant 1.000000e+00 : f32
    %101 = vector.broadcast %cst_36 : f32 to vector<8x128xf32>
    %102 = arith.addf %101, %100 : vector<8x128xf32>
    %103 = arith.divf %101, %102 : vector<8x128xf32>
    %c9 = arith.constant 9 : index
    %c0_37 = arith.constant 0 : index
    %c0_38 = arith.constant 0 : index
    %104 = vector.load %arg2[%c9, %c0_37, %c0_38] : memref<10x128x128xf32, #tpu.memory_space<vmem>>, vector<1x128x128xf32>
    %105 = vector.shape_cast %104 : vector<1x128x128xf32> to vector<128x128xf32>
    %cst_39 = arith.constant dense<0.000000e+00> : vector<8x128xf32>
    %106 = tpu.matmul %92, %105, %cst_39 {dimension_numbers = #tpu.dot_dimension_numbers<[1], [0], [0], [1], [0, 0, 1, 1], [], []>} : vector<8x128xf32>, vector<128x128xf32>, vector<8x128xf32> -> vector<8x128xf32>
    %107 = vector.extract_strided_slice %1 {offsets = [9, 0], sizes = [1, 128], strides = [1, 1]} : vector<10x128xf32> to vector<1x128xf32>
    %108 = vector.broadcast %107 : vector<1x128xf32> to vector<8x128xf32>
    %109 = arith.addf %106, %108 : vector<8x128xf32>
    %110 = arith.mulf %103, %109 : vector<8x128xf32>
    %111 = arith.addf %92, %110 : vector<8x128xf32>
    %cst_40 = arith.constant 0.707106769 : f32
    %112 = vector.broadcast %cst_40 : f32 to vector<8x128xf32>
    %113 = arith.mulf %111, %112 : vector<8x128xf32>
    %c0_41 = arith.constant 0 : index
    %c0_42 = arith.constant 0 : index
    %114 = vector.load %arg4[%c0_41, %c0_42] : memref<8x128xf32, #tpu.memory_space<vmem>>, vector<8x128xf32>
    tpu.vector_store %arg4[%c0_41, %c0_42], %113 {strides = array<i32>} : memref<8x128xf32, #tpu.memory_space<vmem>>, vector<8x128xf32>,
    return
  }
  func.func @transform_0(%arg0: i32) -> (i32, i32) {
    %c0_i32 = arith.constant 0 : i32
    %c0_i32_0 = arith.constant 0 : i32
    return %arg0, %c0_i32 : i32, i32
  }
  func.func @transform_1(%arg0: i32) -> (i32, i32, i32) {
    %c0_i32 = arith.constant 0 : i32
    %c0_i32_0 = arith.constant 0 : i32
    %c0_i32_1 = arith.constant 0 : i32
    %c0_i32_2 = arith.constant 0 : i32
    return %c0_i32, %c0_i32_0, %c0_i32_1 : i32, i32, i32
  }
  func.func @transform_2(%arg0: i32) -> (i32, i32) {
    %c0_i32 = arith.constant 0 : i32
    %c0_i32_0 = arith.constant 0 : i32
    %c0_i32_1 = arith.constant 0 : i32
    return %c0_i32, %c0_i32_0 : i32, i32
  }
  func.func @transform_3(%arg0: i32) -> (i32, i32) {
    %c0_i32 = arith.constant 0 : i32
    %c0_i32_0 = arith.constant 0 : i32
    return %arg0, %c0_i32 : i32, i32
  }
}

</mosaic_0001>

<llo_original>
// kernel: tpu_custom_call.1
$region0: #{tpu_custom_call.1}
  #allocation0 [shape = 'u32[]', space=smem, size = 0x4, offset = 0x4, fixed_abs, tag = 'smem constant byte address 0x4 - core index']
  #allocation1 [shape = 'u32[144,128]{1,0:T(1,128)}', space=vmem, size = 0x12000, scoped, tag = 'internal scratch']
  %s0 = inlined_call_operand.hbm [shape: f32[8,19], index: 0, kind: input, shape index: {}]
  %s1 = inlined_call_operand.hbm [shape: f32[10,128,128], index: 1, kind: input, shape index: {}]
  %s2 = inlined_call_operand.hbm [shape: f32[10,128], index: 2, kind: input, shape index: {}]
  %s3 = inlined_call_operand.hbm [shape: f32[8,128], index: 3, kind: output, shape index: {}]
  %s4 = sld [smem:[#allocation0]]
  $region34: #{tpu_custom_call.1} parent=0
    _
  %s6 = ssub.s32 1, %s4
  %s7 = scalar_select 0, %s6, %s4
  $region1: #{tpu_custom_call.1} parent=0
    #allocation2 [shape = 'u8[4096]{0}', space=vmem, size = 0x1000, scoped, tag = 'input window, operand 0, single buffered']
    #allocation3 [shape = 's32[1]{0}', space=sflag, size = 0x4, scoped, tag = 'scoped memory for tpu_custom_call.1']
    #allocation4 [shape = 's32[1]{0}', space=sflag, size = 0x4, scoped, tag = 'scoped memory for tpu_custom_call.1']
    #allocation5 [shape = 'u8[655360]{0}', space=vmem, size = 0xa0000, scoped, tag = 'input window, operand 1, single buffered']
    #allocation6 [shape = 's32[1]{0}', space=sflag, size = 0x4, scoped, tag = 'scoped memory for tpu_custom_call.1']
    #allocation7 [shape = 'u8[8192]{0}', space=vmem, size = 0x2000, scoped, tag = 'input window, operand 2, single buffered']
    #allocation8 [shape = 'u8[4096]{0}', space=vmem, size = 0x1000, scoped, tag = 'output window, operand 0, single buffered']
    %8 = vsyncpa [#allocation3], 0
    %9 = vsyncpa [#allocation6], 0
    %10 = vsyncpa [#allocation4], 0
    // Predicated region
    $region2: #{tpu_custom_call.1} parent=1 // pred_check
      _
    $region3: #{tpu_custom_call.1} parent=1 // pred_check_branch
      %12 = sbr.rel (0) target = $region5
    $region4: #{tpu_custom_call.1} parent=1 // pred_region
      %s14 = ssub.s32 128, 128
      %15 = vsyncadd [#allocation3], %s14
      %s17 = sshll.u32 [#allocation2], 4
      %s18 = int_to_ptr.vmem [resolvable:$true] %s17
      %20 = dma.hbm_to_vmem [thread:$0]  %s0, 128, %s18, [#allocation3]
    $region5: #{tpu_custom_call.1} parent=1 // pred_fallthru
      _
    // Predicated region
    $region6: #{tpu_custom_call.1} parent=1 // pred_check
      _
    $region7: #{tpu_custom_call.1} parent=1 // pred_check_branch
      %22 = sbr.rel (0) target = $region9
    $region8: #{tpu_custom_call.1} parent=1 // pred_region
      %s24 = ssub.s32 20480, 20480
      %25 = vsyncadd [#allocation6], %s24
      %s26 = sshll.u32 [#allocation5], 4
      %s27 = int_to_ptr.vmem [resolvable:$true] %s26
      %32 = dma.hbm_to_vmem [thread:$0]  %s1, 20480, %s27, [#allocation6], 128, 128, 8
    $region9: #{tpu_custom_call.1} parent=1 // pred_fallthru
      _
    // Predicated region
    $region10: #{tpu_custom_call.1} parent=1 // pred_check
      _
    $region11: #{tpu_custom_call.1} parent=1 // pred_check_branch
      %34 = sbr.rel (0) target = $region13
    $region12: #{tpu_custom_call.1} parent=1 // pred_region
      %s36 = ssub.s32 256, 256
      %37 = vsyncadd [#allocation6], %s36
      %s38 = sshll.u32 [#allocation7], 4
      %s39 = int_to_ptr.vmem [resolvable:$true] %s38
      %44 = dma.hbm_to_vmem [thread:$0]  %s2, 256, %s39, [#allocation6], 128, 128, 8
    $region13: #{tpu_custom_call.1} parent=1 // pred_fallthru
      _
    // Predicated region
    $region14: #{tpu_custom_call.1} parent=1 // pred_check
      _
    $region15: #{tpu_custom_call.1} parent=1 // pred_check_branch
      %46 = sbr.rel (0) target = $region17
    $region16: #{tpu_custom_call.1} parent=1 // pred_region
      %47 = dma.done [#allocation3], 128
    $region17: #{tpu_custom_call.1} parent=1 // pred_fallthru
      _
    // Predicated region
    $region18: #{tpu_custom_call.1} parent=1 // pred_check
      _
    $region19: #{tpu_custom_call.1} parent=1 // pred_check_branch
      %49 = sbr.rel (0) target = $region21
    $region20: #{tpu_custom_call.1} parent=1 // pred_region
      %50 = dma.done [#allocation6], 20480
    $region21: #{tpu_custom_call.1} parent=1 // pred_fallthru
      _
    // Predicated region
    $region22: #{tpu_custom_call.1} parent=1 // pred_check
      _
    $region23: #{tpu_custom_call.1} parent=1 // pred_check_branch
      %52 = sbr.rel (0) target = $region25
    $region24: #{tpu_custom_call.1} parent=1 // pred_region
      %53 = dma.done [#allocation6], 256
    $region25: #{tpu_custom_call.1} parent=1 // pred_fallthru
      _
    %v54 = vld [vmem:[#allocation2] sm:$0xff]
    %v55 = vld [vmem:[#allocation7] sm:$0xff]
    %v56 = vld [vmem:[#allocation7 + $0x8] sm:$0x3]
    %v57 = vcvt.f32.s32.to.zero.pseudo %v54
    %v58 = vlaneseq
    %v59 = vand.u32 %v58, 127
    %60 = vset.pattern.permute.xlu0 16
    %61 = vperm.xlu0 %60, %v57
    %v62 = vpop.permute.xlu0 %61
    %vm63 = vcmp.eq.s32.totalorder %v59, %v62
    %64 = vset.pattern.permute.xlu0 17
    %65 = vperm.xlu0 %64, %v57
    %v66 = vpop.permute.xlu0 %65
    %vm67 = vcmp.eq.s32.totalorder %v59, %v66
    %vm68 = vmor %vm63, %vm67
    %69 = vset.pattern.permute.xlu0 18
    %70 = vperm.xlu0 %69, %v57
    %v71 = vpop.permute.xlu0 %70
    %vm72 = vcmp.eq.s32.totalorder %v59, %v71
    %vm73 = vmor %vm68, %vm72
    %vm74 = vcmask 130048
    %v75 = vsel %vm74, %v54, 0.0
    %v76 = vsel %vm73, 1, 0
    %v77 = vcvt.s32.f32 %v76
    %v78 = vadd.f32 %v75, %v77
    %v79 = vld [vmem:[#allocation5] sm:$0xff]
    %v80 = vld [vmem:[#allocation5 + $0x8] sm:$0xff]
    %v81 = vld [vmem:[#allocation5 + $0x10] sm:$0xff]
    %v82 = vld [vmem:[#allocation5 + $0x18] sm:$0xff]
    %v83 = vld [vmem:[#allocation5 + $0x20] sm:$0xff]
    %v84 = vld [vmem:[#allocation5 + $0x28] sm:$0xff]
    %v85 = vld [vmem:[#allocation5 + $0x30] sm:$0xff]
    %v86 = vld [vmem:[#allocation5 + $0x38] sm:$0xff]
    %v87 = vld [vmem:[#allocation5 + $0x40] sm:$0xff]
    %v88 = vld [vmem:[#allocation5 + $0x48] sm:$0xff]
    %v89 = vld [vmem:[#allocation5 + $0x50] sm:$0xff]
    %v90 = vld [vmem:[#allocation5 + $0x58] sm:$0xff]
    %v91 = vld [vmem:[#allocation5 + $0x60] sm:$0xff]
    %v92 = vld [vmem:[#allocation5 + $0x68] sm:$0xff]
    %v93 = vld [vmem:[#allocation5 + $0x70] sm:$0xff]
    %v94 = vld [vmem:[#allocation5 + $0x78] sm:$0xff]
    %v95 = vlaneseq
    %v96 = vshrl.u32 %v95, 7
    %v97 = vsub.s32 0, %v96
    %v98 = vrot.slane %v55, %v97
    %99 = vmatprep.subr.mxu0 0.0
    %100 = vmatpush1.msra.mxu0 %v79
    %101 = vmatprep.subr.mxu0 0.0
    %102 = vmatpush1.msra.mxu0 %v80
    %103 = vmatprep.subr.mxu0 0.0
    %104 = vmatpush1.msra.mxu0 %v81
    %105 = vmatprep.subr.mxu0 0.0
    %106 = vmatpush1.msra.mxu0 %v82
    %107 = vmatprep.subr.mxu0 0.0
    %108 = vmatpush1.msra.mxu0 %v83
    %109 = vmatprep.subr.mxu0 0.0
    %110 = vmatpush1.msra.mxu0 %v84
    %111 = vmatprep.subr.mxu0 0.0
    %112 = vmatpush1.msra.mxu0 %v85
    %113 = vmatprep.subr.mxu0 0.0
    %114 = vmatpush1.msra.mxu0 %v86
    %115 = vmatprep.subr.mxu0 0.0
    %116 = vmatpush1.msra.mxu0 %v87
    %117 = vmatprep.subr.mxu0 0.0
    %118 = vmatpush1.msra.mxu0 %v88
    %119 = vmatprep.subr.mxu0 0.0
    %120 = vmatpush1.msra.mxu0 %v89
    %121 = vmatprep.subr.mxu0 0.0
    %122 = vmatpush1.msra.mxu0 %v90
    %123 = vmatprep.subr.mxu0 0.0
    %124 = vmatpush1.msra.mxu0 %v91
    %125 = vmatprep.subr.mxu0 0.0
    %126 = vmatpush1.msra.mxu0 %v92
    %127 = vmatprep.subr.mxu0 0.0
    %128 = vmatpush1.msra.mxu0 %v93
    %129 = vmatprep.subr.mxu0 0.0
    %130 = vmatpush1.msra.mxu0 %v94
    %131 = vmatprep.subr.mxu0 0.0
    %132 = vmatpush1.msra.mxu0 0.0
    %133 = vmatprep.subr.mxu0 0.0
    %134 = vmatpush1.msra.mxu0 0.0
    %135 = vmatprep.subr.mxu0 0.0
    %136 = vmatpush1.msra.mxu0 0.0
    %137 = vmatprep.subr.mxu0 0.0
    %138 = vmatpush1.msra.mxu0 0.0
    %139 = vmatprep.subr.mxu0 0.0
    %140 = vmatpush1.msra.mxu0 0.0
    %141 = vmatprep.subr.mxu0 0.0
    %142 = vmatpush1.msra.mxu0 0.0
    %143 = vmatprep.subr.mxu0 0.0
    %144 = vmatpush1.msra.mxu0 0.0
    %145 = vmatprep.subr.mxu0 0.0
    %146 = vmatpush1.msra.mxu0 0.0
    %147 = vmatprep.subr.mxu0 0.0
    %148 = vmatpush1.msra.mxu0 0.0
    %149 = vmatprep.subr.mxu0 0.0
    %150 = vmatpush1.msra.mxu0 0.0
    %151 = vmatprep.subr.mxu0 0.0
    %152 = vmatpush1.msra.mxu0 0.0
    %153 = vmatprep.subr.mxu0 0.0
    %154 = vmatpush1.msra.mxu0 0.0
    %155 = vmatprep.subr.mxu0 0.0
    %156 = vmatpush1.msra.mxu0 0.0
    %157 = vmatprep.subr.mxu0 0.0
    %158 = vmatpush1.msra.mxu0 0.0
    %159 = vmatprep.subr.mxu0 0.0
    %160 = vmatpush1.msra.mxu0 0.0
    %161 = vmatprep.subr.mxu0 0.0
    %162 = vmatpush1.msra.mxu0 0.0
    %163 = vmatprep.mubr.f32.mxu0 0.0
    %164 = vmatmul.mubr.f32.gmra.mrb[0].mxu0 %v78
    %v165 = vpop.f32.mrb[0].mxu0
    %v166 = vadd.f32 %v98, %v165
    %v167 = vpop.f32.mrb[0].mxu0
    %168 = vdwg.mxu0
    %v169 = vxor.u32 %v166, 2147483648
    %v170 = vmul.f32 %v169, 1.442695
    %v171 = vpow.pop %v170
    %v172 = vadd.f32 %v171, 1.0
    %v173 = vrcp.pop %v172
    %v174 = vmul.f32 1.0, %v173
    %s175 = scalar_lea.vmem [#allocation5], 128
    %v176 = vld [vmem:[%s175] sm:$0xff]
    %v177 = vld [vmem:[%s175 + $0x8] sm:$0xff]
    %v178 = vld [vmem:[%s175 + $0x10] sm:$0xff]
    %v179 = vld [vmem:[%s175 + $0x18] sm:$0xff]
    %v180 = vld [vmem:[%s175 + $0x20] sm:$0xff]
    %v181 = vld [vmem:[%s175 + $0x28] sm:$0xff]
    %v182 = vld [vmem:[%s175 + $0x30] sm:$0xff]
    %v183 = vld [vmem:[%s175 + $0x38] sm:$0xff]
    %v184 = vld [vmem:[%s175 + $0x40] sm:$0xff]
    %v185 = vld [vmem:[%s175 + $0x48] sm:$0xff]
    %v186 = vld [vmem:[%s175 + $0x50] sm:$0xff]
    %v187 = vld [vmem:[%s175 + $0x58] sm:$0xff]
    %v188 = vld [vmem:[%s175 + $0x60] sm:$0xff]
    %v189 = vld [vmem:[%s175 + $0x68] sm:$0xff]
    %v190 = vld [vmem:[%s175 + $0x70] sm:$0xff]
    %v191 = vld [vmem:[%s175 + $0x78] sm:$0xff]
    %v192 = vlaneseq
    %v193 = vshrl.u32 %v192, 7
    %v194 = vsub.s32 1, %v193
    %v195 = vrot.slane %v55, %v194
    %196 = vmatprep.subr.mxu0 0.0
    %197 = vmatpush1.msra.mxu0 %v176
    %198 = vmatprep.subr.mxu0 0.0
    %199 = vmatpush1.msra.mxu0 %v177
    %200 = vmatprep.subr.mxu0 0.0
    %201 = vmatpush1.msra.mxu0 %v178
    %202 = vmatprep.subr.mxu0 0.0
    %203 = vmatpush1.msra.mxu0 %v179
    %204 = vmatprep.subr.mxu0 0.0
    %205 = vmatpush1.msra.mxu0 %v180
    %206 = vmatprep.subr.mxu0 0.0
    %207 = vmatpush1.msra.mxu0 %v181
    %208 = vmatprep.subr.mxu0 0.0
    %209 = vmatpush1.msra.mxu0 %v182
    %210 = vmatprep.subr.mxu0 0.0
    %211 = vmatpush1.msra.mxu0 %v183
    %212 = vmatprep.subr.mxu0 0.0
    %213 = vmatpush1.msra.mxu0 %v184
    %214 = vmatprep.subr.mxu0 0.0
    %215 = vmatpush1.msra.mxu0 %v185
    %216 = vmatprep.subr.mxu0 0.0
    %217 = vmatpush1.msra.mxu0 %v186
    %218 = vmatprep.subr.mxu0 0.0
    %219 = vmatpush1.msra.mxu0 %v187
    %220 = vmatprep.subr.mxu0 0.0
    %221 = vmatpush1.msra.mxu0 %v188
    %222 = vmatprep.subr.mxu0 0.0
    %223 = vmatpush1.msra.mxu0 %v189
    %224 = vmatprep.subr.mxu0 0.0
    %225 = vmatpush1.msra.mxu0 %v190
    %226 = vmatprep.subr.mxu0 0.0
    %227 = vmatpush1.msra.mxu0 %v191
    %228 = vmatprep.subr.mxu0 0.0
    %229 = vmatpush1.msra.mxu0 0.0
    %230 = vmatprep.subr.mxu0 0.0
    %231 = vmatpush1.msra.mxu0 0.0
    %232 = vmatprep.subr.mxu0 0.0
    %233 = vmatpush1.msra.mxu0 0.0
    %234 = vmatprep.subr.mxu0 0.0
    %235 = vmatpush1.msra.mxu0 0.0
    %236 = vmatprep.subr.mxu0 0.0
    %237 = vmatpush1.msra.mxu0 0.0
    %238 = vmatprep.subr.mxu0 0.0
    %239 = vmatpush1.msra.mxu0 0.0
    %240 = vmatprep.subr.mxu0 0.0
    %241 = vmatpush1.msra.mxu0 0.0
    %242 = vmatprep.subr.mxu0 0.0
    %243 = vmatpush1.msra.mxu0 0.0
    %244 = vmatprep.subr.mxu0 0.0
    %245 = vmatpush1.msra.mxu0 0.0
    %246 = vmatprep.subr.mxu0 0.0
    %247 = vmatpush1.msra.mxu0 0.0
    %248 = vmatprep.subr.mxu0 0.0
    %249 = vmatpush1.msra.mxu0 0.0
    %250 = vmatprep.subr.mxu0 0.0
    %251 = vmatpush1.msra.mxu0 0.0
    %252 = vmatprep.subr.mxu0 0.0
    %253 = vmatpush1.msra.mxu0 0.0
    %254 = vmatprep.subr.mxu0 0.0
    %255 = vmatpush1.msra.mxu0 0.0
    %256 = vmatprep.subr.mxu0 0.0
    %257 = vmatpush1.msra.mxu0 0.0
    %258 = vmatprep.subr.mxu0 0.0
    %259 = vmatpush1.msra.mxu0 0.0
    %260 = vmatprep.mubr.f32.mxu0 0.0
    %261 = vmatmul.mubr.f32.gmra.mrb[0].mxu0 %v174
    %v262 = vpop.f32.mrb[0].mxu0
    %v263 = vadd.f32 %v195, %v262
    %v264 = vpop.f32.mrb[0].mxu0
    %265 = vdwg.mxu0
    %s266 = scalar_lea.vmem [#allocation5], 256
    %v267 = vld [vmem:[%s266] sm:$0xff]
    %v268 = vld [vmem:[%s266 + $0x8] sm:$0xff]
    %v269 = vld [vmem:[%s266 + $0x10] sm:$0xff]
    %v270 = vld [vmem:[%s266 + $0x18] sm:$0xff]
    %v271 = vld [vmem:[%s266 + $0x20] sm:$0xff]
    %v272 = vld [vmem:[%s266 + $0x28] sm:$0xff]
    %v273 = vld [vmem:[%s266 + $0x30] sm:$0xff]
    %v274 = vld [vmem:[%s266 + $0x38] sm:$0xff]
    %v275 = vld [vmem:[%s266 + $0x40] sm:$0xff]
    %v276 = vld [vmem:[%s266 + $0x48] sm:$0xff]
    %v277 = vld [vmem:[%s266 + $0x50] sm:$0xff]
    %v278 = vld [vmem:[%s266 + $0x58] sm:$0xff]
    %v279 = vld [vmem:[%s266 + $0x60] sm:$0xff]
    %v280 = vld [vmem:[%s266 + $0x68] sm:$0xff]
    %v281 = vld [vmem:[%s266 + $0x70] sm:$0xff]
    %v282 = vld [vmem:[%s266 + $0x78] sm:$0xff]
    %v283 = vlaneseq
    %v284 = vshrl.u32 %v283, 7
    %v285 = vsub.s32 2, %v284
    %v286 = vrot.slane %v55, %v285
    %287 = vmatprep.subr.mxu0 0.0
    %288 = vmatpush1.msra.mxu0 %v267
    %289 = vmatprep.subr.mxu0 0.0
    %290 = vmatpush1.msra.mxu0 %v268
    %291 = vmatprep.subr.mxu0 0.0
    %292 = vmatpush1.msra.mxu0 %v269
    %293 = vmatprep.subr.mxu0 0.0
    %294 = vmatpush1.msra.mxu0 %v270
    %295 = vmatprep.subr.mxu0 0.0
    %296 = vmatpush1.msra.mxu0 %v271
    %297 = vmatprep.subr.mxu0 0.0
    %298 = vmatpush1.msra.mxu0 %v272
    %299 = vmatprep.subr.mxu0 0.0
    %300 = vmatpush1.msra.mxu0 %v273
    %301 = vmatprep.subr.mxu0 0.0
    %302 = vmatpush1.msra.mxu0 %v274
    %303 = vmatprep.subr.mxu0 0.0
    %304 = vmatpush1.msra.mxu0 %v275
    %305 = vmatprep.subr.mxu0 0.0
    %306 = vmatpush1.msra.mxu0 %v276
    %307 = vmatprep.subr.mxu0 0.0
    %308 = vmatpush1.msra.mxu0 %v277
    %309 = vmatprep.subr.mxu0 0.0
    %310 = vmatpush1.msra.mxu0 %v278
    %311 = vmatprep.subr.mxu0 0.0
    %312 = vmatpush1.msra.mxu0 %v279
    %313 = vmatprep.subr.mxu0 0.0
    %314 = vmatpush1.msra.mxu0 %v280
    %315 = vmatprep.subr.mxu0 0.0
    %316 = vmatpush1.msra.mxu0 %v281
    %317 = vmatprep.subr.mxu0 0.0
    %318 = vmatpush1.msra.mxu0 %v282
    %319 = vmatprep.subr.mxu0 0.0
    %320 = vmatpush1.msra.mxu0 0.0
    %321 = vmatprep.subr.mxu0 0.0
    %322 = vmatpush1.msra.mxu0 0.0
    %323 = vmatprep.subr.mxu0 0.0
    %324 = vmatpush1.msra.mxu0 0.0
    %325 = vmatprep.subr.mxu0 0.0
    %326 = vmatpush1.msra.mxu0 0.0
    %327 = vmatprep.subr.mxu0 0.0
    %328 = vmatpush1.msra.mxu0 0.0
    %329 = vmatprep.subr.mxu0 0.0
    %330 = vmatpush1.msra.mxu0 0.0
    %331 = vmatprep.subr.mxu0 0.0
    %332 = vmatpush1.msra.mxu0 0.0
    %333 = vmatprep.subr.mxu0 0.0
    %334 = vmatpush1.msra.mxu0 0.0
    %335 = vmatprep.subr.mxu0 0.0
    %336 = vmatpush1.msra.mxu0 0.0
    %337 = vmatprep.subr.mxu0 0.0
    %338 = vmatpush1.msra.mxu0 0.0
    %339 = vmatprep.subr.mxu0 0.0
    %340 = vmatpush1.msra.mxu0 0.0
    %341 = vmatprep.subr.mxu0 0.0
    %342 = vmatpush1.msra.mxu0 0.0
    %343 = vmatprep.subr.mxu0 0.0
    %344 = vmatpush1.msra.mxu0 0.0
    %345 = vmatprep.subr.mxu0 0.0
    %346 = vmatpush1.msra.mxu0 0.0
    %347 = vmatprep.subr.mxu0 0.0
    %348 = vmatpush1.msra.mxu0 0.0
    %349 = vmatprep.subr.mxu0 0.0
    %350 = vmatpush1.msra.mxu0 0.0
    %351 = vmatprep.mubr.f32.mxu0 0.0
    %352 = vmatmul.mubr.f32.gmra.mrb[0].mxu0 %v263
    %v353 = vpop.f32.mrb[0].mxu0
    %v354 = vadd.f32 %v286, %v353
    %v355 = vpop.f32.mrb[0].mxu0
    %356 = vdwg.mxu0
    %v357 = vxor.u32 %v354, 2147483648
    %v358 = vmul.f32 %v357, 1.442695
    %v359 = vpow.pop %v358
    %v360 = vadd.f32 %v359, 1.0
    %v361 = vrcp.pop %v360
    %v362 = vmul.f32 1.0, %v361
    %s363 = scalar_lea.vmem [#allocation5], 384
    %v364 = vld [vmem:[%s363] sm:$0xff]
    %v365 = vld [vmem:[%s363 + $0x8] sm:$0xff]
    %v366 = vld [vmem:[%s363 + $0x10] sm:$0xff]
    %v367 = vld [vmem:[%s363 + $0x18] sm:$0xff]
    %v368 = vld [vmem:[%s363 + $0x20] sm:$0xff]
    %v369 = vld [vmem:[%s363 + $0x28] sm:$0xff]
    %v370 = vld [vmem:[%s363 + $0x30] sm:$0xff]
    %v371 = vld [vmem:[%s363 + $0x38] sm:$0xff]
    %v372 = vld [vmem:[%s363 + $0x40] sm:$0xff]
    %v373 = vld [vmem:[%s363 + $0x48] sm:$0xff]
    %v374 = vld [vmem:[%s363 + $0x50] sm:$0xff]
    %v375 = vld [vmem:[%s363 + $0x58] sm:$0xff]
    %v376 = vld [vmem:[%s363 + $0x60] sm:$0xff]
    %v377 = vld [vmem:[%s363 + $0x68] sm:$0xff]
    %v378 = vld [vmem:[%s363 + $0x70] sm:$0xff]
    %v379 = vld [vmem:[%s363 + $0x78] sm:$0xff]
    %v380 = vlaneseq
    %v381 = vshrl.u32 %v380, 7
    %v382 = vsub.s32 3, %v381
    %v383 = vrot.slane %v55, %v382
    %384 = vmatprep.subr.mxu0 0.0
    %385 = vmatpush1.msra.mxu0 %v364
    %386 = vmatprep.subr.mxu0 0.0
    %387 = vmatpush1.msra.mxu0 %v365
    %388 = vmatprep.subr.mxu0 0.0
    %389 = vmatpush1.msra.mxu0 %v366
    %390 = vmatprep.subr.mxu0 0.0
    %391 = vmatpush1.msra.mxu0 %v367
    %392 = vmatprep.subr.mxu0 0.0
    %393 = vmatpush1.msra.mxu0 %v368
    %394 = vmatprep.subr.mxu0 0.0
    %395 = vmatpush1.msra.mxu0 %v369
    %396 = vmatprep.subr.mxu0 0.0
    %397 = vmatpush1.msra.mxu0 %v370
    %398 = vmatprep.subr.mxu0 0.0
    %399 = vmatpush1.msra.mxu0 %v371
    %400 = vmatprep.subr.mxu0 0.0
    %401 = vmatpush1.msra.mxu0 %v372
    %402 = vmatprep.subr.mxu0 0.0
    %403 = vmatpush1.msra.mxu0 %v373
    %404 = vmatprep.subr.mxu0 0.0
    %405 = vmatpush1.msra.mxu0 %v374
    %406 = vmatprep.subr.mxu0 0.0
    %407 = vmatpush1.msra.mxu0 %v375
    %408 = vmatprep.subr.mxu0 0.0
    %409 = vmatpush1.msra.mxu0 %v376
    %410 = vmatprep.subr.mxu0 0.0
    %411 = vmatpush1.msra.mxu0 %v377
    %412 = vmatprep.subr.mxu0 0.0
    %413 = vmatpush1.msra.mxu0 %v378
    %414 = vmatprep.subr.mxu0 0.0
    %415 = vmatpush1.msra.mxu0 %v379
    %416 = vmatprep.subr.mxu0 0.0
    %417 = vmatpush1.msra.mxu0 0.0
    %418 = vmatprep.subr.mxu0 0.0
    %419 = vmatpush1.msra.mxu0 0.0
    %420 = vmatprep.subr.mxu0 0.0
    %421 = vmatpush1.msra.mxu0 0.0
    %422 = vmatprep.subr.mxu0 0.0
    %423 = vmatpush1.msra.mxu0 0.0
    %424 = vmatprep.subr.mxu0 0.0
    %425 = vmatpush1.msra.mxu0 0.0
    %426 = vmatprep.subr.mxu0 0.0
    %427 = vmatpush1.msra.mxu0 0.0
    %428 = vmatprep.subr.mxu0 0.0
    %429 = vmatpush1.msra.mxu0 0.0
    %430 = vmatprep.subr.mxu0 0.0
    %431 = vmatpush1.msra.mxu0 0.0
    %432 = vmatprep.subr.mxu0 0.0
    %433 = vmatpush1.msra.mxu0 0.0
    %434 = vmatprep.subr.mxu0 0.0
    %435 = vmatpush1.msra.mxu0 0.0
    %436 = vmatprep.subr.mxu0 0.0
    %437 = vmatpush1.msra.mxu0 0.0
    %438 = vmatprep.subr.mxu0 0.0
    %439 = vmatpush1.msra.mxu0 0.0
    %440 = vmatprep.subr.mxu0 0.0
    %441 = vmatpush1.msra.mxu0 0.0
    %442 = vmatprep.subr.mxu0 0.0
    %443 = vmatpush1.msra.mxu0 0.0
    %444 = vmatprep.subr.mxu0 0.0
    %445 = vmatpush1.msra.mxu0 0.0
    %446 = vmatprep.subr.mxu0 0.0
    %447 = vmatpush1.msra.mxu0 0.0
    %448 = vmatprep.mubr.f32.mxu0 0.0
    %449 = vmatmul.mubr.f32.gmra.mrb[0].mxu0 %v263
    %v450 = vpop.f32.mrb[0].mxu0
    %v451 = vadd.f32 %v383, %v450
    %v452 = vpop.f32.mrb[0].mxu0
    %453 = vdwg.mxu0
    %v454 = vmul.f32 %v362, %v451
    %v455 = vadd.f32 %v263, %v454
    %v456 = vmul.f32 %v455, 0.70710677
    %s457 = scalar_lea.vmem [#allocation5], 512
    %v458 = vld [vmem:[%s457] sm:$0xff]
    %v459 = vld [vmem:[%s457 + $0x8] sm:$0xff]
    %v460 = vld [vmem:[%s457 + $0x10] sm:$0xff]
    %v461 = vld [vmem:[%s457 + $0x18] sm:$0xff]
    %v462 = vld [vmem:[%s457 + $0x20] sm:$0xff]
    %v463 = vld [vmem:[%s457 + $0x28] sm:$0xff]
    %v464 = vld [vmem:[%s457 + $0x30] sm:$0xff]
    %v465 = vld [vmem:[%s457 + $0x38] sm:$0xff]
    %v466 = vld [vmem:[%s457 + $0x40] sm:$0xff]
    %v467 = vld [vmem:[%s457 + $0x48] sm:$0xff]
    %v468 = vld [vmem:[%s457 + $0x50] sm:$0xff]
    %v469 = vld [vmem:[%s457 + $0x58] sm:$0xff]
    %v470 = vld [vmem:[%s457 + $0x60] sm:$0xff]
    %v471 = vld [vmem:[%s457 + $0x68] sm:$0xff]
    %v472 = vld [vmem:[%s457 + $0x70] sm:$0xff]
    %v473 = vld [vmem:[%s457 + $0x78] sm:$0xff]
    %v474 = vlaneseq
    %v475 = vshrl.u32 %v474, 7
    %v476 = vsub.s32 4, %v475
    %v477 = vrot.slane %v55, %v476
    %478 = vmatprep.subr.mxu0 0.0
    %479 = vmatpush1.msra.mxu0 %v458
    %480 = vmatprep.subr.mxu0 0.0
    %481 = vmatpush1.msra.mxu0 %v459
    %482 = vmatprep.subr.mxu0 0.0
    %483 = vmatpush1.msra.mxu0 %v460
    %484 = vmatprep.subr.mxu0 0.0
    %485 = vmatpush1.msra.mxu0 %v461
    %486 = vmatprep.subr.mxu0 0.0
    %487 = vmatpush1.msra.mxu0 %v462
    %488 = vmatprep.subr.mxu0 0.0
    %489 = vmatpush1.msra.mxu0 %v463
    %490 = vmatprep.subr.mxu0 0.0
    %491 = vmatpush1.msra.mxu0 %v464
    %492 = vmatprep.subr.mxu0 0.0
    %493 = vmatpush1.msra.mxu0 %v465
    %494 = vmatprep.subr.mxu0 0.0
    %495 = vmatpush1.msra.mxu0 %v466
    %496 = vmatprep.subr.mxu0 0.0
    %497 = vmatpush1.msra.mxu0 %v467
    %498 = vmatprep.subr.mxu0 0.0
    %499 = vmatpush1.msra.mxu0 %v468
    %500 = vmatprep.subr.mxu0 0.0
    %501 = vmatpush1.msra.mxu0 %v469
    %502 = vmatprep.subr.mxu0 0.0
    %503 = vmatpush1.msra.mxu0 %v470
    %504 = vmatprep.subr.mxu0 0.0
    %505 = vmatpush1.msra.mxu0 %v471
    %506 = vmatprep.subr.mxu0 0.0
    %507 = vmatpush1.msra.mxu0 %v472
    %508 = vmatprep.subr.mxu0 0.0
    %509 = vmatpush1.msra.mxu0 %v473
    %510 = vmatprep.subr.mxu0 0.0
    %511 = vmatpush1.msra.mxu0 0.0
    %512 = vmatprep.subr.mxu0 0.0
    %513 = vmatpush1.msra.mxu0 0.0
    %514 = vmatprep.subr.mxu0 0.0
    %515 = vmatpush1.msra.mxu0 0.0
    %516 = vmatprep.subr.mxu0 0.0
    %517 = vmatpush1.msra.mxu0 0.0
    %518 = vmatprep.subr.mxu0 0.0
    %519 = vmatpush1.msra.mxu0 0.0
    %520 = vmatprep.subr.mxu0 0.0
    %521 = vmatpush1.msra.mxu0 0.0
    %522 = vmatprep.subr.mxu0 0.0
    %523 = vmatpush1.msra.mxu0 0.0
    %524 = vmatprep.subr.mxu0 0.0
    %525 = vmatpush1.msra.mxu0 0.0
    %526 = vmatprep.subr.mxu0 0.0
    %527 = vmatpush1.msra.mxu0 0.0
    %528 = vmatprep.subr.mxu0 0.0
    %529 = vmatpush1.msra.mxu0 0.0
    %530 = vmatprep.subr.mxu0 0.0
    %531 = vmatpush1.msra.mxu0 0.0
    %532 = vmatprep.subr.mxu0 0.0
    %533 = vmatpush1.msra.mxu0 0.0
    %534 = vmatprep.subr.mxu0 0.0
    %535 = vmatpush1.msra.mxu0 0.0
    %536 = vmatprep.subr.mxu0 0.0
    %537 = vmatpush1.msra.mxu0 0.0
    %538 = vmatprep.subr.mxu0 0.0
    %539 = vmatpush1.msra.mxu0 0.0
    %540 = vmatprep.subr.mxu0 0.0
    %541 = vmatpush1.msra.mxu0 0.0
    %542 = vmatprep.mubr.f32.mxu0 0.0
    %543 = vmatmul.mubr.f32.gmra.mrb[0].mxu0 %v456
    %v544 = vpop.f32.mrb[0].mxu0
    %v545 = vadd.f32 %v477, %v544
    %v546 = vpop.f32.mrb[0].mxu0
    %547 = vdwg.mxu0
    %s548 = scalar_lea.vmem [#allocation5], 640
    %v549 = vld [vmem:[%s548] sm:$0xff]
    %v550 = vld [vmem:[%s548 + $0x8] sm:$0xff]
    %v551 = vld [vmem:[%s548 + $0x10] sm:$0xff]
    %v552 = vld [vmem:[%s548 + $0x18] sm:$0xff]
    %v553 = vld [vmem:[%s548 + $0x20] sm:$0xff]
    %v554 = vld [vmem:[%s548 + $0x28] sm:$0xff]
    %v555 = vld [vmem:[%s548 + $0x30] sm:$0xff]
    %v556 = vld [vmem:[%s548 + $0x38] sm:$0xff]
    %v557 = vld [vmem:[%s548 + $0x40] sm:$0xff]
    %v558 = vld [vmem:[%s548 + $0x48] sm:$0xff]
    %v559 = vld [vmem:[%s548 + $0x50] sm:$0xff]
    %v560 = vld [vmem:[%s548 + $0x58] sm:$0xff]
    %v561 = vld [vmem:[%s548 + $0x60] sm:$0xff]
    %v562 = vld [vmem:[%s548 + $0x68] sm:$0xff]
    %v563 = vld [vmem:[%s548 + $0x70] sm:$0xff]
    %v564 = vld [vmem:[%s548 + $0x78] sm:$0xff]
    %v565 = vlaneseq
    %v566 = vshrl.u32 %v565, 7
    %v567 = vsub.s32 5, %v566
    %v568 = vrot.slane %v55, %v567
    %569 = vmatprep.subr.mxu0 0.0
    %570 = vmatpush1.msra.mxu0 %v549
    %571 = vmatprep.subr.mxu0 0.0
    %572 = vmatpush1.msra.mxu0 %v550
    %573 = vmatprep.subr.mxu0 0.0
    %574 = vmatpush1.msra.mxu0 %v551
    %575 = vmatprep.subr.mxu0 0.0
    %576 = vmatpush1.msra.mxu0 %v552
    %577 = vmatprep.subr.mxu0 0.0
    %578 = vmatpush1.msra.mxu0 %v553
    %579 = vmatprep.subr.mxu0 0.0
    %580 = vmatpush1.msra.mxu0 %v554
    %581 = vmatprep.subr.mxu0 0.0
    %582 = vmatpush1.msra.mxu0 %v555
    %583 = vmatprep.subr.mxu0 0.0
    %584 = vmatpush1.msra.mxu0 %v556
    %585 = vmatprep.subr.mxu0 0.0
    %586 = vmatpush1.msra.mxu0 %v557
    %587 = vmatprep.subr.mxu0 0.0
    %588 = vmatpush1.msra.mxu0 %v558
    %589 = vmatprep.subr.mxu0 0.0
    %590 = vmatpush1.msra.mxu0 %v559
    %591 = vmatprep.subr.mxu0 0.0
    %592 = vmatpush1.msra.mxu0 %v560
    %593 = vmatprep.subr.mxu0 0.0
    %594 = vmatpush1.msra.mxu0 %v561
    %595 = vmatprep.subr.mxu0 0.0
    %596 = vmatpush1.msra.mxu0 %v562
    %597 = vmatprep.subr.mxu0 0.0
    %598 = vmatpush1.msra.mxu0 %v563
    %599 = vmatprep.subr.mxu0 0.0
    %600 = vmatpush1.msra.mxu0 %v564
    %601 = vmatprep.subr.mxu0 0.0
    %602 = vmatpush1.msra.mxu0 0.0
    %603 = vmatprep.subr.mxu0 0.0
    %604 = vmatpush1.msra.mxu0 0.0
    %605 = vmatprep.subr.mxu0 0.0
    %606 = vmatpush1.msra.mxu0 0.0
    %607 = vmatprep.subr.mxu0 0.0
    %608 = vmatpush1.msra.mxu0 0.0
    %609 = vmatprep.subr.mxu0 0.0
    %610 = vmatpush1.msra.mxu0 0.0
    %611 = vmatprep.subr.mxu0 0.0
    %612 = vmatpush1.msra.mxu0 0.0
    %613 = vmatprep.subr.mxu0 0.0
    %614 = vmatpush1.msra.mxu0 0.0
    %615 = vmatprep.subr.mxu0 0.0
    %616 = vmatpush1.msra.mxu0 0.0
    %617 = vmatprep.subr.mxu0 0.0
    %618 = vmatpush1.msra.mxu0 0.0
    %619 = vmatprep.subr.mxu0 0.0
    %620 = vmatpush1.msra.mxu0 0.0
    %621 = vmatprep.subr.mxu0 0.0
    %622 = vmatpush1.msra.mxu0 0.0
    %623 = vmatprep.subr.mxu0 0.0
    %624 = vmatpush1.msra.mxu0 0.0
    %625 = vmatprep.subr.mxu0 0.0
    %626 = vmatpush1.msra.mxu0 0.0
    %627 = vmatprep.subr.mxu0 0.0
    %628 = vmatpush1.msra.mxu0 0.0
    %629 = vmatprep.subr.mxu0 0.0
    %630 = vmatpush1.msra.mxu0 0.0
    %631 = vmatprep.subr.mxu0 0.0
    %632 = vmatpush1.msra.mxu0 0.0
    %633 = vmatprep.mubr.f32.mxu0 0.0
    %634 = vmatmul.mubr.f32.gmra.mrb[0].mxu0 %v545
    %v635 = vpop.f32.mrb[0].mxu0
    %v636 = vadd.f32 %v568, %v635
    %v637 = vpop.f32.mrb[0].mxu0
    %638 = vdwg.mxu0
    %v639 = vxor.u32 %v636, 2147483648
    %v640 = vmul.f32 %v639, 1.442695
    %v641 = vpow.pop %v640
    %v642 = vadd.f32 %v641, 1.0
    %v643 = vrcp.pop %v642
    %v644 = vmul.f32 1.0, %v643
    %s645 = scalar_lea.vmem [#allocation5], 768
    %v646 = vld [vmem:[%s645] sm:$0xff]
    %v647 = vld [vmem:[%s645 + $0x8] sm:$0xff]
    %v648 = vld [vmem:[%s645 + $0x10] sm:$0xff]
    %v649 = vld [vmem:[%s645 + $0x18] sm:$0xff]
    %v650 = vld [vmem:[%s645 + $0x20] sm:$0xff]
    %v651 = vld [vmem:[%s645 + $0x28] sm:$0xff]
    %v652 = vld [vmem:[%s645 + $0x30] sm:$0xff]
    %v653 = vld [vmem:[%s645 + $0x38] sm:$0xff]
    %v654 = vld [vmem:[%s645 + $0x40] sm:$0xff]
    %v655 = vld [vmem:[%s645 + $0x48] sm:$0xff]
    %v656 = vld [vmem:[%s645 + $0x50] sm:$0xff]
    %v657 = vld [vmem:[%s645 + $0x58] sm:$0xff]
    %v658 = vld [vmem:[%s645 + $0x60] sm:$0xff]
    %v659 = vld [vmem:[%s645 + $0x68] sm:$0xff]
    %v660 = vld [vmem:[%s645 + $0x70] sm:$0xff]
    %v661 = vld [vmem:[%s645 + $0x78] sm:$0xff]
    %v662 = vlaneseq
    %v663 = vshrl.u32 %v662, 7
    %v664 = vsub.s32 6, %v663
    %v665 = vrot.slane %v55, %v664
    %666 = vmatprep.subr.mxu0 0.0
    %667 = vmatpush1.msra.mxu0 %v646
    %668 = vmatprep.subr.mxu0 0.0
    %669 = vmatpush1.msra.mxu0 %v647
    %670 = vmatprep.subr.mxu0 0.0
    %671 = vmatpush1.msra.mxu0 %v648
    %672 = vmatprep.subr.mxu0 0.0
    %673 = vmatpush1.msra.mxu0 %v649
    %674 = vmatprep.subr.mxu0 0.0
    %675 = vmatpush1.msra.mxu0 %v650
    %676 = vmatprep.subr.mxu0 0.0
    %677 = vmatpush1.msra.mxu0 %v651
    %678 = vmatprep.subr.mxu0 0.0
    %679 = vmatpush1.msra.mxu0 %v652
    %680 = vmatprep.subr.mxu0 0.0
    %681 = vmatpush1.msra.mxu0 %v653
    %682 = vmatprep.subr.mxu0 0.0
    %683 = vmatpush1.msra.mxu0 %v654
    %684 = vmatprep.subr.mxu0 0.0
    %685 = vmatpush1.msra.mxu0 %v655
    %686 = vmatprep.subr.mxu0 0.0
    %687 = vmatpush1.msra.mxu0 %v656
    %688 = vmatprep.subr.mxu0 0.0
    %689 = vmatpush1.msra.mxu0 %v657
    %690 = vmatprep.subr.mxu0 0.0
    %691 = vmatpush1.msra.mxu0 %v658
    %692 = vmatprep.subr.mxu0 0.0
    %693 = vmatpush1.msra.mxu0 %v659
    %694 = vmatprep.subr.mxu0 0.0
    %695 = vmatpush1.msra.mxu0 %v660
    %696 = vmatprep.subr.mxu0 0.0
    %697 = vmatpush1.msra.mxu0 %v661
    %698 = vmatprep.subr.mxu0 0.0
    %699 = vmatpush1.msra.mxu0 0.0
    %700 = vmatprep.subr.mxu0 0.0
    %701 = vmatpush1.msra.mxu0 0.0
    %702 = vmatprep.subr.mxu0 0.0
    %703 = vmatpush1.msra.mxu0 0.0
    %704 = vmatprep.subr.mxu0 0.0
    %705 = vmatpush1.msra.mxu0 0.0
    %706 = vmatprep.subr.mxu0 0.0
    %707 = vmatpush1.msra.mxu0 0.0
    %708 = vmatprep.subr.mxu0 0.0
    %709 = vmatpush1.msra.mxu0 0.0
    %710 = vmatprep.subr.mxu0 0.0
    %711 = vmatpush1.msra.mxu0 0.0
    %712 = vmatprep.subr.mxu0 0.0
    %713 = vmatpush1.msra.mxu0 0.0
    %714 = vmatprep.subr.mxu0 0.0
    %715 = vmatpush1.msra.mxu0 0.0
    %716 = vmatprep.subr.mxu0 0.0
    %717 = vmatpush1.msra.mxu0 0.0
    %718 = vmatprep.subr.mxu0 0.0
    %719 = vmatpush1.msra.mxu0 0.0
    %720 = vmatprep.subr.mxu0 0.0
    %721 = vmatpush1.msra.mxu0 0.0
    %722 = vmatprep.subr.mxu0 0.0
    %723 = vmatpush1.msra.mxu0 0.0
    %724 = vmatprep.subr.mxu0 0.0
    %725 = vmatpush1.msra.mxu0 0.0
    %726 = vmatprep.subr.mxu0 0.0
    %727 = vmatpush1.msra.mxu0 0.0
    %728 = vmatprep.subr.mxu0 0.0
    %729 = vmatpush1.msra.mxu0 0.0
    %730 = vmatprep.mubr.f32.mxu0 0.0
    %731 = vmatmul.mubr.f32.gmra.mrb[0].mxu0 %v545
    %v732 = vpop.f32.mrb[0].mxu0
    %v733 = vadd.f32 %v665, %v732
    %v734 = vpop.f32.mrb[0].mxu0
    %735 = vdwg.mxu0
    %v736 = vmul.f32 %v644, %v733
    %v737 = vadd.f32 %v545, %v736
    %v738 = vmul.f32 %v737, 0.70710677
    %s739 = scalar_lea.vmem [#allocation5], 896
    %v740 = vld [vmem:[%s739] sm:$0xff]
    %v741 = vld [vmem:[%s739 + $0x8] sm:$0xff]
    %v742 = vld [vmem:[%s739 + $0x10] sm:$0xff]
    %v743 = vld [vmem:[%s739 + $0x18] sm:$0xff]
    %v744 = vld [vmem:[%s739 + $0x20] sm:$0xff]
    %v745 = vld [vmem:[%s739 + $0x28] sm:$0xff]
    %v746 = vld [vmem:[%s739 + $0x30] sm:$0xff]
    %v747 = vld [vmem:[%s739 + $0x38] sm:$0xff]
    %v748 = vld [vmem:[%s739 + $0x40] sm:$0xff]
    %v749 = vld [vmem:[%s739 + $0x48] sm:$0xff]
    %v750 = vld [vmem:[%s739 + $0x50] sm:$0xff]
    %v751 = vld [vmem:[%s739 + $0x58] sm:$0xff]
    %v752 = vld [vmem:[%s739 + $0x60] sm:$0xff]
    %v753 = vld [vmem:[%s739 + $0x68] sm:$0xff]
    %v754 = vld [vmem:[%s739 + $0x70] sm:$0xff]
    %v755 = vld [vmem:[%s739 + $0x78] sm:$0xff]
    %v756 = vlaneseq
    %v757 = vshrl.u32 %v756, 7
    %v758 = vsub.s32 7, %v757
    %v759 = vrot.slane %v55, %v758
    %760 = vmatprep.subr.mxu0 0.0
    %761 = vmatpush1.msra.mxu0 %v740
    %762 = vmatprep.subr.mxu0 0.0
    %763 = vmatpush1.msra.mxu0 %v741
    %764 = vmatprep.subr.mxu0 0.0
    %765 = vmatpush1.msra.mxu0 %v742
    %766 = vmatprep.subr.mxu0 0.0
    %767 = vmatpush1.msra.mxu0 %v743
    %768 = vmatprep.subr.mxu0 0.0
    %769 = vmatpush1.msra.mxu0 %v744
    %770 = vmatprep.subr.mxu0 0.0
    %771 = vmatpush1.msra.mxu0 %v745
    %772 = vmatprep.subr.mxu0 0.0
    %773 = vmatpush1.msra.mxu0 %v746
    %774 = vmatprep.subr.mxu0 0.0
    %775 = vmatpush1.msra.mxu0 %v747
    %776 = vmatprep.subr.mxu0 0.0
    %777 = vmatpush1.msra.mxu0 %v748
    %778 = vmatprep.subr.mxu0 0.0
    %779 = vmatpush1.msra.mxu0 %v749
    %780 = vmatprep.subr.mxu0 0.0
    %781 = vmatpush1.msra.mxu0 %v750
    %782 = vmatprep.subr.mxu0 0.0
    %783 = vmatpush1.msra.mxu0 %v751
    %784 = vmatprep.subr.mxu0 0.0
    %785 = vmatpush1.msra.mxu0 %v752
    %786 = vmatprep.subr.mxu0 0.0
    %787 = vmatpush1.msra.mxu0 %v753
    %788 = vmatprep.subr.mxu0 0.0
    %789 = vmatpush1.msra.mxu0 %v754
    %790 = vmatprep.subr.mxu0 0.0
    %791 = vmatpush1.msra.mxu0 %v755
    %792 = vmatprep.subr.mxu0 0.0
    %793 = vmatpush1.msra.mxu0 0.0
    %794 = vmatprep.subr.mxu0 0.0
    %795 = vmatpush1.msra.mxu0 0.0
    %796 = vmatprep.subr.mxu0 0.0
    %797 = vmatpush1.msra.mxu0 0.0
    %798 = vmatprep.subr.mxu0 0.0
    %799 = vmatpush1.msra.mxu0 0.0
    %800 = vmatprep.subr.mxu0 0.0
    %801 = vmatpush1.msra.mxu0 0.0
    %802 = vmatprep.subr.mxu0 0.0
    %803 = vmatpush1.msra.mxu0 0.0
    %804 = vmatprep.subr.mxu0 0.0
    %805 = vmatpush1.msra.mxu0 0.0
    %806 = vmatprep.subr.mxu0 0.0
    %807 = vmatpush1.msra.mxu0 0.0
    %808 = vmatprep.subr.mxu0 0.0
    %809 = vmatpush1.msra.mxu0 0.0
    %810 = vmatprep.subr.mxu0 0.0
    %811 = vmatpush1.msra.mxu0 0.0
    %812 = vmatprep.subr.mxu0 0.0
    %813 = vmatpush1.msra.mxu0 0.0
    %814 = vmatprep.subr.mxu0 0.0
    %815 = vmatpush1.msra.mxu0 0.0
    %816 = vmatprep.subr.mxu0 0.0
    %817 = vmatpush1.msra.mxu0 0.0
    %818 = vmatprep.subr.mxu0 0.0
    %819 = vmatpush1.msra.mxu0 0.0
    %820 = vmatprep.subr.mxu0 0.0
    %821 = vmatpush1.msra.mxu0 0.0
    %822 = vmatprep.subr.mxu0 0.0
    %823 = vmatpush1.msra.mxu0 0.0
    %824 = vmatprep.mubr.f32.mxu0 0.0
    %825 = vmatmul.mubr.f32.gmra.mrb[0].mxu0 %v738
    %v826 = vpop.f32.mrb[0].mxu0
    %v827 = vadd.f32 %v759, %v826
    %v828 = vpop.f32.mrb[0].mxu0
    %829 = vdwg.mxu0
    %s830 = scalar_lea.vmem [#allocation5], 1024
    %v831 = vld [vmem:[%s830] sm:$0xff]
    %v832 = vld [vmem:[%s830 + $0x8] sm:$0xff]
    %v833 = vld [vmem:[%s830 + $0x10] sm:$0xff]
    %v834 = vld [vmem:[%s830 + $0x18] sm:$0xff]
    %v835 = vld [vmem:[%s830 + $0x20] sm:$0xff]
    %v836 = vld [vmem:[%s830 + $0x28] sm:$0xff]
    %v837 = vld [vmem:[%s830 + $0x30] sm:$0xff]
    %v838 = vld [vmem:[%s830 + $0x38] sm:$0xff]
    %v839 = vld [vmem:[%s830 + $0x40] sm:$0xff]
    %v840 = vld [vmem:[%s830 + $0x48] sm:$0xff]
    %v841 = vld [vmem:[%s830 + $0x50] sm:$0xff]
    %v842 = vld [vmem:[%s830 + $0x58] sm:$0xff]
    %v843 = vld [vmem:[%s830 + $0x60] sm:$0xff]
    %v844 = vld [vmem:[%s830 + $0x68] sm:$0xff]
    %v845 = vld [vmem:[%s830 + $0x70] sm:$0xff]
    %v846 = vld [vmem:[%s830 + $0x78] sm:$0xff]
    %v847 = vlaneseq
    %v848 = vshrl.u32 %v847, 7
    %v849 = vsub.s32 0, %v848
    %v850 = vrot.slane %v56, %v849
    %851 = vmatprep.subr.mxu0 0.0
    %852 = vmatpush1.msra.mxu0 %v831
    %853 = vmatprep.subr.mxu0 0.0
    %854 = vmatpush1.msra.mxu0 %v832
    %855 = vmatprep.subr.mxu0 0.0
    %856 = vmatpush1.msra.mxu0 %v833
    %857 = vmatprep.subr.mxu0 0.0
    %858 = vmatpush1.msra.mxu0 %v834
    %859 = vmatprep.subr.mxu0 0.0
    %860 = vmatpush1.msra.mxu0 %v835
    %861 = vmatprep.subr.mxu0 0.0
    %862 = vmatpush1.msra.mxu0 %v836
    %863 = vmatprep.subr.mxu0 0.0
    %864 = vmatpush1.msra.mxu0 %v837
    %865 = vmatprep.subr.mxu0 0.0
    %866 = vmatpush1.msra.mxu0 %v838
    %867 = vmatprep.subr.mxu0 0.0
    %868 = vmatpush1.msra.mxu0 %v839
    %869 = vmatprep.subr.mxu0 0.0
    %870 = vmatpush1.msra.mxu0 %v840
    %871 = vmatprep.subr.mxu0 0.0
    %872 = vmatpush1.msra.mxu0 %v841
    %873 = vmatprep.subr.mxu0 0.0
    %874 = vmatpush1.msra.mxu0 %v842
    %875 = vmatprep.subr.mxu0 0.0
    %876 = vmatpush1.msra.mxu0 %v843
    %877 = vmatprep.subr.mxu0 0.0
    %878 = vmatpush1.msra.mxu0 %v844
    %879 = vmatprep.subr.mxu0 0.0
    %880 = vmatpush1.msra.mxu0 %v845
    %881 = vmatprep.subr.mxu0 0.0
    %882 = vmatpush1.msra.mxu0 %v846
    %883 = vmatprep.subr.mxu0 0.0
    %884 = vmatpush1.msra.mxu0 0.0
    %885 = vmatprep.subr.mxu0 0.0
    %886 = vmatpush1.msra.mxu0 0.0
    %887 = vmatprep.subr.mxu0 0.0
    %888 = vmatpush1.msra.mxu0 0.0
    %889 = vmatprep.subr.mxu0 0.0
    %890 = vmatpush1.msra.mxu0 0.0
    %891 = vmatprep.subr.mxu0 0.0
    %892 = vmatpush1.msra.mxu0 0.0
    %893 = vmatprep.subr.mxu0 0.0
    %894 = vmatpush1.msra.mxu0 0.0
    %895 = vmatprep.subr.mxu0 0.0
    %896 = vmatpush1.msra.mxu0 0.0
    %897 = vmatprep.subr.mxu0 0.0
    %898 = vmatpush1.msra.mxu0 0.0
    %899 = vmatprep.subr.mxu0 0.0
    %900 = vmatpush1.msra.mxu0 0.0
    %901 = vmatprep.subr.mxu0 0.0
    %902 = vmatpush1.msra.mxu0 0.0
    %903 = vmatprep.subr.mxu0 0.0
    %904 = vmatpush1.msra.mxu0 0.0
    %905 = vmatprep.subr.mxu0 0.0
    %906 = vmatpush1.msra.mxu0 0.0
    %907 = vmatprep.subr.mxu0 0.0
    %908 = vmatpush1.msra.mxu0 0.0
    %909 = vmatprep.subr.mxu0 0.0
    %910 = vmatpush1.msra.mxu0 0.0
    %911 = vmatprep.subr.mxu0 0.0
    %912 = vmatpush1.msra.mxu0 0.0
    %913 = vmatprep.subr.mxu0 0.0
    %914 = vmatpush1.msra.mxu0 0.0
    %915 = vmatprep.mubr.f32.mxu0 0.0
    %916 = vmatmul.mubr.f32.gmra.mrb[0].mxu0 %v827
    %v917 = vpop.f32.mrb[0].mxu0
    %v918 = vadd.f32 %v850, %v917
    %v919 = vpop.f32.mrb[0].mxu0
    %920 = vdwg.mxu0
    %v921 = vxor.u32 %v918, 2147483648
    %v922 = vmul.f32 %v921, 1.442695
    %v923 = vpow.pop %v922
    %v924 = vadd.f32 %v923, 1.0
    %v925 = vrcp.pop %v924
    %v926 = vmul.f32 1.0, %v925
    %s927 = scalar_lea.vmem [#allocation5], 1152
    %v928 = vld [vmem:[%s927] sm:$0xff]
    %v929 = vld [vmem:[%s927 + $0x8] sm:$0xff]
    %v930 = vld [vmem:[%s927 + $0x10] sm:$0xff]
    %v931 = vld [vmem:[%s927 + $0x18] sm:$0xff]
    %v932 = vld [vmem:[%s927 + $0x20] sm:$0xff]
    %v933 = vld [vmem:[%s927 + $0x28] sm:$0xff]
    %v934 = vld [vmem:[%s927 + $0x30] sm:$0xff]
    %v935 = vld [vmem:[%s927 + $0x38] sm:$0xff]
    %v936 = vld [vmem:[%s927 + $0x40] sm:$0xff]
    %v937 = vld [vmem:[%s927 + $0x48] sm:$0xff]
    %v938 = vld [vmem:[%s927 + $0x50] sm:$0xff]
    %v939 = vld [vmem:[%s927 + $0x58] sm:$0xff]
    %v940 = vld [vmem:[%s927 + $0x60] sm:$0xff]
    %v941 = vld [vmem:[%s927 + $0x68] sm:$0xff]
    %v942 = vld [vmem:[%s927 + $0x70] sm:$0xff]
    %v943 = vld [vmem:[%s927 + $0x78] sm:$0xff]
    %v944 = vlaneseq
    %v945 = vshrl.u32 %v944, 7
    %v946 = vsub.s32 1, %v945
    %v947 = vrot.slane %v56, %v946
    %948 = vmatprep.subr.mxu0 0.0
    %949 = vmatpush1.msra.mxu0 %v928
    %950 = vmatprep.subr.mxu0 0.0
    %951 = vmatpush1.msra.mxu0 %v929
    %952 = vmatprep.subr.mxu0 0.0
    %953 = vmatpush1.msra.mxu0 %v930
    %954 = vmatprep.subr.mxu0 0.0
    %955 = vmatpush1.msra.mxu0 %v931
    %956 = vmatprep.subr.mxu0 0.0
    %957 = vmatpush1.msra.mxu0 %v932
    %958 = vmatprep.subr.mxu0 0.0
    %959 = vmatpush1.msra.mxu0 %v933
    %960 = vmatprep.subr.mxu0 0.0
    %961 = vmatpush1.msra.mxu0 %v934
    %962 = vmatprep.subr.mxu0 0.0
    %963 = vmatpush1.msra.mxu0 %v935
    %964 = vmatprep.subr.mxu0 0.0
    %965 = vmatpush1.msra.mxu0 %v936
    %966 = vmatprep.subr.mxu0 0.0
    %967 = vmatpush1.msra.mxu0 %v937
    %968 = vmatprep.subr.mxu0 0.0
    %969 = vmatpush1.msra.mxu0 %v938
    %970 = vmatprep.subr.mxu0 0.0
    %971 = vmatpush1.msra.mxu0 %v939
    %972 = vmatprep.subr.mxu0 0.0
    %973 = vmatpush1.msra.mxu0 %v940
    %974 = vmatprep.subr.mxu0 0.0
    %975 = vmatpush1.msra.mxu0 %v941
    %976 = vmatprep.subr.mxu0 0.0
    %977 = vmatpush1.msra.mxu0 %v942
    %978 = vmatprep.subr.mxu0 0.0
    %979 = vmatpush1.msra.mxu0 %v943
    %980 = vmatprep.subr.mxu0 0.0
    %981 = vmatpush1.msra.mxu0 0.0
    %982 = vmatprep.subr.mxu0 0.0
    %983 = vmatpush1.msra.mxu0 0.0
    %984 = vmatprep.subr.mxu0 0.0
    %985 = vmatpush1.msra.mxu0 0.0
    %986 = vmatprep.subr.mxu0 0.0
    %987 = vmatpush1.msra.mxu0 0.0
    %988 = vmatprep.subr.mxu0 0.0
    %989 = vmatpush1.msra.mxu0 0.0
    %990 = vmatprep.subr.mxu0 0.0
    %991 = vmatpush1.msra.mxu0 0.0
    %992 = vmatprep.subr.mxu0 0.0
    %993 = vmatpush1.msra.mxu0 0.0
    %994 = vmatprep.subr.mxu0 0.0
    %995 = vmatpush1.msra.mxu0 0.0
    %996 = vmatprep.subr.mxu0 0.0
    %997 = vmatpush1.msra.mxu0 0.0
    %998 = vmatprep.subr.mxu0 0.0
    %999 = vmatpush1.msra.mxu0 0.0
    %1000 = vmatprep.subr.mxu0 0.0
    %1001 = vmatpush1.msra.mxu0 0.0
    %1002 = vmatprep.subr.mxu0 0.0
    %1003 = vmatpush1.msra.mxu0 0.0
    %1004 = vmatprep.subr.mxu0 0.0
    %1005 = vmatpush1.msra.mxu0 0.0
    %1006 = vmatprep.subr.mxu0 0.0
    %1007 = vmatpush1.msra.mxu0 0.0
    %1008 = vmatprep.subr.mxu0 0.0
    %1009 = vmatpush1.msra.mxu0 0.0
    %1010 = vmatprep.subr.mxu0 0.0
    %1011 = vmatpush1.msra.mxu0 0.0
    %1012 = vmatprep.mubr.f32.mxu0 0.0
    %1013 = vmatmul.mubr.f32.gmra.mrb[0].mxu0 %v827
    %v1014 = vpop.f32.mrb[0].mxu0
    %v1015 = vadd.f32 %v947, %v1014
    %v1016 = vpop.f32.mrb[0].mxu0
    %1017 = vdwg.mxu0
    %v1018 = vmul.f32 %v926, %v1015
    %v1019 = vadd.f32 %v827, %v1018
    %v1020 = vmul.f32 %v1019, 0.70710677
    %1021 = vst [vmem:[#allocation8] sm:$0xff] %v1020
    // Predicated region
    $region26: #{tpu_custom_call.1} parent=1 // pred_check
      _
    $region27: #{tpu_custom_call.1} parent=1 // pred_check_branch
      %1023 = sbr.rel (0) target = $region29
    $region28: #{tpu_custom_call.1} parent=1 // pred_region
      %s1025 = ssub.s32 128, 128
      %1026 = vsyncadd [#allocation4], %s1025
      %s1028 = sshll.u32 [#allocation8], 4
      %s1029 = int_to_ptr.vmem [resolvable:$true] %s1028
      %1031 = dma.vmem_to_hbm [thread:$0]  %s1029, 128, %s3, [#allocation4]
    $region29: #{tpu_custom_call.1} parent=1 // pred_fallthru
      _
    // Predicated region
    $region30: #{tpu_custom_call.1} parent=1 // pred_check
      _
    $region31: #{tpu_custom_call.1} parent=1 // pred_check_branch
      %1033 = sbr.rel (0) target = $region33
    $region32: #{tpu_custom_call.1} parent=1 // pred_region
      %1034 = dma.done [#allocation4], 128
    $region33: #{tpu_custom_call.1} parent=1 // pred_fallthru
      _
    %1035 = vsyncpa [#allocation3], 1
    %1036 = vsyncpa [#allocation6], 1
    %1037 = vsyncpa [#allocation4], 1

</llo_original>
